<compile_context>
chip_gen: v7x
topology: tpu7x:2x2x1
jax: 0.10.0
libtpu: 0.0.40
codegen_flags: <defaults>
</compile_context>

<pallas_src>
import jax
import jax.numpy as jnp
from jax.experimental import pallas as pl
from jax.experimental.pallas import tpu as pltpu


_LANES = 512            # C: lane-axis width (multiple of 128)
_ROWS_PER_BLOCK = 512   # TR cap: rows per grid step (multiple of 8) -> 256K pts


def sphere_sdf_kernel(params_ref, pts_ref, out_ref):
    # params_ref: SMEM (4,) f32 = (cx, cy, cz, radius)   [scalar prefetch]
    # pts_ref:    VMEM (3, TR, C) f32, SoA points block (8-sublane dense)
    # out_ref:    VMEM (TR, C) f32, dense output block
    cx = params_ref[0]
    cy = params_ref[1]
    cz = params_ref[2]
    r = params_ref[3]

    dx = pts_ref[0] - cx                 # (TR, C)  VPU
    dy = pts_ref[1] - cy
    dz = pts_ref[2] - cz
    sq = dx * dx + dy * dy + dz * dz     # 2 VPU adds, no XLU cross-lane reduce
    out_ref[...] = jnp.sqrt(sq) - r      # sqrt -> EUP slot (free filler)


def _round_up(a, b):
    return ((a + b - 1) // b) * b


def _sphere_sdf_impl(points, center, radius):
    """points: any shape reshapable to (-1, 3); center: (1,3) or (3,); radius: scalar.

    Returns (N, 1) float32 = ||points - center|| - radius.
    """
    pts = jnp.reshape(points, (-1, 3)).astype(jnp.float32)
    n = pts.shape[0]

    c_lanes = _LANES
    # Rows of the (R, C) slab; padded to a multiple of 8 sublanes.
    r_rows = _round_up(pl.cdiv(n, c_lanes), 8)
    # Rows per grid step: multiple of 8, capped at _ROWS_PER_BLOCK, and split
    # into >= 2 steps when the input allows (megacore on v7x).
    tr = min(_ROWS_PER_BLOCK, max(8, _round_up(pl.cdiv(r_rows, 2), 8)))
    n_pad = r_rows * c_lanes

    # SoA + small pad (< 8*C points) + reshape: fuses into one pass under jit.
    # TODO(synk): if many spheres are queried against the same points, hoist
    # this SoA conversion out of the per-sphere call and amortize it.
    pts_t = pts.T                                   # (3, N)
    if n_pad != n:
        pts_t = jnp.pad(pts_t, ((0, 0), (0, n_pad - n)))
    pts_t = pts_t.reshape(3, r_rows, c_lanes)       # (3, R, C)

    # center + radius packed into one SMEM scalar-prefetch vector.
    params = jnp.concatenate(
        [
            jnp.reshape(center, (3,)).astype(jnp.float32),
            jnp.reshape(radius, (1,)).astype(jnp.float32),
        ]
    )

    grid = (pl.cdiv(r_rows, tr),)
    # Actual double-buffered footprint: 2 * (in_block + out_block).
    block_bytes = (3 + 1) * tr * c_lanes * 4
    vmem_limit = 2 * block_bytes + (4 << 20)        # + headroom

    out = pl.pallas_call(
        sphere_sdf_kernel,
        out_shape=jax.ShapeDtypeStruct((r_rows, c_lanes), jnp.float32),
        grid_spec=pltpu.PrefetchScalarGridSpec(
            num_scalar_prefetch=1,
            grid=grid,
            in_specs=[
                pl.BlockSpec((3, tr, c_lanes), lambda i, params: (0, i, 0)),
            ],
            out_specs=pl.BlockSpec((tr, c_lanes), lambda i, params: (i, 0)),
        ),
        compiler_params=pltpu.CompilerParams(
            dimension_semantics=("parallel",),
            vmem_limit_bytes=vmem_limit,
        ),
    )(params, pts_t)

    # Back to the PyTorch output layout (N, 1).
    return out.reshape(n_pad)[:n].reshape(n, 1)


# Keep the whole wrapper (transpose + pad + kernel + final slice) in one jit.
sphere_sdf = jax.jit(_sphere_sdf_impl)


if __name__ == "__main__":
    key = jax.random.PRNGKey(0)
    k_pts, k_ctr, k_rad = jax.random.split(key, 3)

    # "cfg": deterministic synthetic parameters (center (1,3), radius scalar)
    center = jax.random.normal(k_ctr, (1, 3), dtype=jnp.float32)
    radius = jnp.abs(jax.random.normal(k_rad, (), dtype=jnp.float32)) + 0.5

    # Example input: batch of ray sample points, reshapable to (-1, 3).
    points = jax.random.normal(k_pts, (2, 256, 3), dtype=jnp.float32)

    out = sphere_sdf(points, center, radius)
    out = jax.block_until_ready(out)

    # Reference check (plain JAX).
    pts_flat = points.reshape(-1, 3)
    ref = jnp.linalg.norm(pts_flat - center, axis=-1, keepdims=True) - radius
    assert out.shape == (512, 1)
    assert jnp.allclose(out, ref, atol=1e-5, rtol=1e-5), "mismatch vs reference"

    print("KERNEL_OK")
</pallas_src>

<mosaic_0001>
module attributes {stable_mosaic.version = 11 : i64} {
  func.func @sphere_sdf_kernel(%arg0: i32, %arg1: memref<4xf32, #tpu.memory_space<smem>>, %arg2: memref<3x8x512xf32, #tpu.memory_space<vmem>>, %arg3: memref<8x512xf32, #tpu.memory_space<vmem>>) attributes {dimension_semantics = [#tpu.dimension_semantics<parallel>], iteration_bounds = array<i64: 1>, scalar_prefetch = 1 : i64, scratch_operands = 0 : i64, tpu.core_type = #tpu.core_type<tc>, window_params = [{transform_indices = @transform_0, window_bounds = array<i64: 3, 8, 512>}, {transform_indices = @transform_1, window_bounds = array<i64: 8, 512>}]} {
    %c0 = arith.constant 0 : index
    %0 = memref.load %arg1[%c0] : memref<4xf32, #tpu.memory_space<smem>>
    %c1 = arith.constant 1 : index
    %1 = memref.load %arg1[%c1] : memref<4xf32, #tpu.memory_space<smem>>
    %c2 = arith.constant 2 : index
    %2 = memref.load %arg1[%c2] : memref<4xf32, #tpu.memory_space<smem>>
    %c3 = arith.constant 3 : index
    %3 = memref.load %arg1[%c3] : memref<4xf32, #tpu.memory_space<smem>>
    %c0_0 = arith.constant 0 : index
    %c0_1 = arith.constant 0 : index
    %c0_2 = arith.constant 0 : index
    %4 = vector.load %arg2[%c0_0, %c0_1, %c0_2] : memref<3x8x512xf32, #tpu.memory_space<vmem>>, vector<1x8x512xf32>
    %5 = vector.shape_cast %4 : vector<1x8x512xf32> to vector<8x512xf32>
    %6 = vector.broadcast %0 : f32 to vector<8x512xf32>
    %7 = arith.subf %5, %6 : vector<8x512xf32>
    %c1_3 = arith.constant 1 : index
    %c0_4 = arith.constant 0 : index
    %c0_5 = arith.constant 0 : index
    %8 = vector.load %arg2[%c1_3, %c0_4, %c0_5] : memref<3x8x512xf32, #tpu.memory_space<vmem>>, vector<1x8x512xf32>
    %9 = vector.shape_cast %8 : vector<1x8x512xf32> to vector<8x512xf32>
    %10 = vector.broadcast %1 : f32 to vector<8x512xf32>
    %11 = arith.subf %9, %10 : vector<8x512xf32>
    %c2_6 = arith.constant 2 : index
    %c0_7 = arith.constant 0 : index
    %c0_8 = arith.constant 0 : index
    %12 = vector.load %arg2[%c2_6, %c0_7, %c0_8] : memref<3x8x512xf32, #tpu.memory_space<vmem>>, vector<1x8x512xf32>
    %13 = vector.shape_cast %12 : vector<1x8x512xf32> to vector<8x512xf32>
    %14 = vector.broadcast %2 : f32 to vector<8x512xf32>
    %15 = arith.subf %13, %14 : vector<8x512xf32>
    %16 = arith.mulf %7, %7 : vector<8x512xf32>
    %17 = arith.mulf %11, %11 : vector<8x512xf32>
    %18 = arith.addf %16, %17 : vector<8x512xf32>
    %19 = arith.mulf %15, %15 : vector<8x512xf32>
    %20 = arith.addf %18, %19 : vector<8x512xf32>
    %21 = math.sqrt %20 : vector<8x512xf32>
    %22 = vector.broadcast %3 : f32 to vector<8x512xf32>
    %23 = arith.subf %21, %22 : vector<8x512xf32>
    %c0_9 = arith.constant 0 : index
    %c0_10 = arith.constant 0 : index
    %24 = vector.load %arg3[%c0_9, %c0_10] : memref<8x512xf32, #tpu.memory_space<vmem>>, vector<8x512xf32>
    tpu.vector_store %arg3[%c0_9, %c0_10], %23 {strides = array<i32>} : memref<8x512xf32, #tpu.memory_space<vmem>>, vector<8x512xf32>,
    return
  }
  func.func @transform_0(%arg0: i32, %arg1: memref<4xf32, #tpu.memory_space<smem>>) -> (i32, i32, i32) {
    %c0_i32 = arith.constant 0 : i32
    %c0_i32_0 = arith.constant 0 : i32
    %c0_i32_1 = arith.constant 0 : i32
    return %c0_i32, %arg0, %c0_i32_0 : i32, i32, i32
  }
  func.func @transform_1(%arg0: i32, %arg1: memref<4xf32, #tpu.memory_space<smem>>) -> (i32, i32) {
    %c0_i32 = arith.constant 0 : i32
    %c0_i32_0 = arith.constant 0 : i32
    return %arg0, %c0_i32 : i32, i32
  }
}

</mosaic_0001>

<llo_original>
// kernel: _sphere_sdf_impl.1
$region0: #{_sphere_sdf_impl.1}
  #allocation0 [shape = 'u32[]', space=smem, size = 0x4, offset = 0x4, fixed_abs, tag = 'smem constant byte address 0x4 - core index']
  #allocation1 [shape = 'u32[144,128]{1,0:T(1,128)}', space=vmem, size = 0x12000, scoped, tag = 'internal scratch']
  #allocation2 [shape = 's32[1]{0}', space=sflag, size = 0x4, scoped, tag = 'scoped memory for _sphere_sdf_impl.1']
  #allocation3 [shape = 'u8[512]{0}', space=smem, size = 0x200, scoped, tag = 'prefetched SMEM operand 0']
  %s0 = inlined_call_operand.vmem [shape: f32[4], index: 0, kind: input, shape index: {}]
  %s1 = inlined_call_operand.vmem [shape: f32[3,8,512], index: 1, kind: input, shape index: {}]
  %s2 = inlined_call_operand.vmem [shape: f32[8,512], index: 2, kind: output, shape index: {}]
  %s3 = sld [smem:[#allocation0]]
  $region14: #{_sphere_sdf_impl.1} parent=0
    _
  %s5 = ssub.s32 1, %s3
  %s6 = scalar_select 0, %s5, %s3
  %s7 = sshll.u32 %s0, 4
  %s8 = int_to_ptr.vmem [resolvable:$true] %s7
  %10 = dma.vmem_to_smem %s8, 16, [#allocation3], [#allocation2]
  %11 = dma.done [#allocation2], 16
  %12 = sfence
  // Predicated region
  $region2: #{_sphere_sdf_impl.1} parent=0 // pred_check
    _
  $region3: #{_sphere_sdf_impl.1} parent=0 // pred_check_branch
    %14 = sbr.rel (0) target = $region5
  $region4: #{_sphere_sdf_impl.1} parent=0 // pred_region
    _
  $region5: #{_sphere_sdf_impl.1} parent=0 // pred_fallthru
    _
  %s15 = sld [smem:[#allocation3]]
  %s16 = sld [smem:[#allocation3 + $0x1]]
  %s17 = sld [smem:[#allocation3 + $0x2]]
  %s18 = sld [smem:[#allocation3 + $0x3]]
  %v19 = vld [vmem:[%s1] sm:$0xff]
  %v20 = vld [vmem:[%s1 + $0x8] sm:$0xff]
  %v21 = vld [vmem:[%s1 + $0x10] sm:$0xff]
  %v22 = vld [vmem:[%s1 + $0x18] sm:$0xff]
  %v23 = vstv %s15
  %v24 = vsub.f32 %v19, %v23
  %v25 = vsub.f32 %v20, %v23
  %v26 = vsub.f32 %v21, %v23
  %v27 = vsub.f32 %v22, %v23
  %s28 = scalar_lea.vmem %s1, 32
  %v29 = vld [vmem:[%s28] sm:$0xff]
  %v30 = vld [vmem:[%s28 + $0x8] sm:$0xff]
  %v31 = vld [vmem:[%s28 + $0x10] sm:$0xff]
  %v32 = vld [vmem:[%s28 + $0x18] sm:$0xff]
  %v33 = vstv %s16
  %v34 = vsub.f32 %v29, %v33
  %v35 = vsub.f32 %v30, %v33
  %v36 = vsub.f32 %v31, %v33
  %v37 = vsub.f32 %v32, %v33
  %s38 = scalar_lea.vmem %s1, 64
  %v39 = vld [vmem:[%s38] sm:$0xff]
  %v40 = vld [vmem:[%s38 + $0x8] sm:$0xff]
  %v41 = vld [vmem:[%s38 + $0x10] sm:$0xff]
  %v42 = vld [vmem:[%s38 + $0x18] sm:$0xff]
  %v43 = vstv %s17
  %v44 = vsub.f32 %v39, %v43
  %v45 = vsub.f32 %v40, %v43
  %v46 = vsub.f32 %v41, %v43
  %v47 = vsub.f32 %v42, %v43
  %v48 = vmul.f32 %v24, %v24
  %v49 = vmul.f32 %v25, %v25
  %v50 = vmul.f32 %v26, %v26
  %v51 = vmul.f32 %v27, %v27
  %v52 = vmul.f32 %v34, %v34
  %v53 = vmul.f32 %v35, %v35
  %v54 = vmul.f32 %v36, %v36
  %v55 = vmul.f32 %v37, %v37
  %v56 = vadd.f32 %v48, %v52
  %v57 = vadd.f32 %v49, %v53
  %v58 = vadd.f32 %v50, %v54
  %v59 = vadd.f32 %v51, %v55
  %v60 = vmul.f32 %v44, %v44
  %v61 = vmul.f32 %v45, %v45
  %v62 = vmul.f32 %v46, %v46
  %v63 = vmul.f32 %v47, %v47
  %v64 = vadd.f32 %v56, %v60
  %v65 = vadd.f32 %v57, %v61
  %v66 = vadd.f32 %v58, %v62
  %v67 = vadd.f32 %v59, %v63
  %v68 = vrsqrt.pop %v64
  %v69 = vmul.f32 %v64, %v68
  %vm70 = vcmp.eq.f32.partialorder %v64, inf
  %v71 = vsel %vm70, %v64, %v69
  %vm72 = vcmp.eq.f32.partialorder %v64, 0.0
  %v73 = vand.u32 %v64, 2147483648
  %v74 = vsel %vm72, %v73, %v71
  %v75 = vrsqrt.pop %v65
  %v76 = vmul.f32 %v65, %v75
  %vm77 = vcmp.eq.f32.partialorder %v65, inf
  %v78 = vsel %vm77, %v65, %v76
  %vm79 = vcmp.eq.f32.partialorder %v65, 0.0
  %v80 = vand.u32 %v65, 2147483648
  %v81 = vsel %vm79, %v80, %v78
  %v82 = vrsqrt.pop %v66
  %v83 = vmul.f32 %v66, %v82
  %vm84 = vcmp.eq.f32.partialorder %v66, inf
  %v85 = vsel %vm84, %v66, %v83
  %vm86 = vcmp.eq.f32.partialorder %v66, 0.0
  %v87 = vand.u32 %v66, 2147483648
  %v88 = vsel %vm86, %v87, %v85
  %v89 = vrsqrt.pop %v67
  %v90 = vmul.f32 %v67, %v89
  %vm91 = vcmp.eq.f32.partialorder %v67, inf
  %v92 = vsel %vm91, %v67, %v90
  %vm93 = vcmp.eq.f32.partialorder %v67, 0.0
  %v94 = vand.u32 %v67, 2147483648
  %v95 = vsel %vm93, %v94, %v92
  %v96 = vstv %s18
  %v97 = vsub.f32 %v74, %v96
  %v98 = vsub.f32 %v81, %v96
  %v99 = vsub.f32 %v88, %v96
  %v100 = vsub.f32 %v95, %v96
  %101 = vst [vmem:[%s2] sm:$0xff] %v97
  %102 = vst [vmem:[%s2 + $0x8] sm:$0xff] %v98
  %103 = vst [vmem:[%s2 + $0x10] sm:$0xff] %v99
  %104 = vst [vmem:[%s2 + $0x18] sm:$0xff] %v100
  // Predicated region
  $region6: #{_sphere_sdf_impl.1} parent=0 // pred_check
    _
  $region7: #{_sphere_sdf_impl.1} parent=0 // pred_check_branch
    %106 = sbr.rel (0) target = $region9
  $region8: #{_sphere_sdf_impl.1} parent=0 // pred_region
    _
  $region9: #{_sphere_sdf_impl.1} parent=0 // pred_fallthru
    _
  // Predicated region
  $region10: #{_sphere_sdf_impl.1} parent=0 // pred_check
    _
  $region11: #{_sphere_sdf_impl.1} parent=0 // pred_check_branch
    %108 = sbr.rel (0) target = $region13
  $region12: #{_sphere_sdf_impl.1} parent=0 // pred_region
    _
  $region13: #{_sphere_sdf_impl.1} parent=0 // pred_fallthru
    _

</llo_original>
